<compile_context>
chip_gen: v5e
topology: v5e:2x2
jax: 0.10.0
libtpu: 0.0.40
codegen_flags: <defaults>
</compile_context>

<pallas_src>
import jax
import jax.numpy as jnp
from jax.experimental import pallas as pl
from jax.experimental.pallas import tpu as pltpu


def dynamics_kernel(x_ref, w_ref, o_ref):
    # y[m, o] = sum_k x[m, k] * w[o, k]: contract the shared feature axis of
    # both operands.  This folds the nn.Linear transpose into the MXU op, so
    # no wrapper-side w.T (which would be a separate un-hidden HBM pass).
    o_ref[...] = jax.lax.dot_general(
        x_ref[...],
        w_ref[...],
        dimension_numbers=(((1,), (1,)), ((), ())),
        preferred_element_type=jnp.float32,
    ).astype(o_ref.dtype)


def dynamics_forward(x, w, *, block_m=512, compute_dtype=None):
    """y = x @ w^T (PyTorch nn.Linear convention, no bias).

    x: (batch, b) ; w: (b, b).
    Batch is tiled in blocks of `block_m` rows; the weight block is resident
    in VMEM across the whole grid.  `compute_dtype=jnp.bfloat16` halves HBM
    traffic / feeds the bf16 MXU for large b (f32 accumulation kept).
    """
    out_dtype = x.dtype
    batch, b = x.shape
    assert w.shape == (b, b)

    if compute_dtype is not None:
        x = x.astype(compute_dtype)
        w = w.astype(compute_dtype)

    # Batch tiling: ~512-row tiles hide the DMA behind MXU work (measured
    # ~85% of HBM roofline); small problems collapse to a single full-extent
    # block which satisfies the (8,128) rule by matching the full array shape.
    if batch <= block_m:
        tm = batch
        padded = batch
    else:
        tm = block_m
        padded = pl.cdiv(batch, tm) * tm
        if padded != batch:
            x = jnp.pad(x, ((0, padded - batch), (0, 0)))
    grid_m = padded // tm

    itm = jnp.dtype(x.dtype).itemsize
    cost = pl.CostEstimate(
        flops=2 * batch * b * b,
        transcendentals=0,
        bytes_accessed=itm * (2 * batch * b + b * b),
    )

    # VMEM budget: double-buffered x / out tiles + (conservatively 2x) the
    # resident weight + headroom; clamp to v7x's 64 MiB per-TensorCore VMEM.
    # TODO(synk): for b >= ~2048 add K-tiling with an accumulator scratch so
    # the weight block itself fits v7x's 64 MiB (or force compute_dtype=bf16).
    vmem_bytes = (2 * tm * b * itm) * 2 + 2 * b * b * itm + (1 << 20)
    vmem_bytes = int(min(max(vmem_bytes, 32 << 20), 64 << 20))

    out = pl.pallas_call(
        dynamics_kernel,
        out_shape=jax.ShapeDtypeStruct((padded, b), out_dtype),
        grid_spec=pl.GridSpec(
            grid=(grid_m,),
            in_specs=[
                pl.BlockSpec((tm, b), lambda i: (i, 0)),
                # Same weight block every grid step -> stays resident in VMEM.
                pl.BlockSpec((b, b), lambda i: (0, 0)),
            ],
            out_specs=pl.BlockSpec((tm, b), lambda i: (i, 0)),
        ),
        compiler_params=pltpu.CompilerParams(
            # Batch tiles are independent -> shard across v7x's 2 TensorCores;
            # neutral on single-TC v5e / v6e.
            dimension_semantics=("parallel",),
            vmem_limit_bytes=vmem_bytes,
        ),
        cost_estimate=cost,
    )(x, w)

    return out if padded == batch else out[:batch]


def make_dynamics_weight(key, b, init_scale):
    """Deterministic re-implementation of the PyTorch __init__ weight init."""
    # gaussian_init_(b, std=1): Normal(0, std/n_units) with std=1 -> scale 1/b
    w0 = jax.random.normal(key, (b, b), dtype=jnp.float32) * (1.0 / b)
    # torch.svd: A = U diag(S) V^T ; weight <- U @ V^T * init_scale
    u, _, vh = jnp.linalg.svd(w0, full_matrices=False)
    return (u @ vh) * init_scale


if __name__ == "__main__":
    key = jax.random.PRNGKey(0)
    k_w1, k_x1, k_w2, k_x2 = jax.random.split(key, 4)

    # --- Test 1: tiny demo shape (single full-extent block path) ------------
    batch, b, init_scale = 8, 32, 1.0
    w = make_dynamics_weight(k_w1, b, init_scale)
    x = jax.random.normal(k_x1, (batch, b), dtype=jnp.float32)
    y = jax.block_until_ready(dynamics_forward(x, w))
    y_ref = x @ w.T
    assert jnp.allclose(y, y_ref, atol=1e-5, rtol=1e-5), "mismatch (small path)"

    # --- Test 2: tiled path with a ragged final batch block -----------------
    batch2, b2 = 520, 128  # 520 is not a multiple of block_m=256
    w2 = make_dynamics_weight(k_w2, b2, 0.5)
    x2 = jax.random.normal(k_x2, (batch2, b2), dtype=jnp.float32)
    y2 = jax.block_until_ready(dynamics_forward(x2, w2, block_m=256))
    y2_ref = x2 @ w2.T
    assert y2.shape == (batch2, b2), "bad output shape (tiled path)"
    assert jnp.allclose(y2, y2_ref, atol=1e-5, rtol=1e-5), "mismatch (tiled path)"

    print("KERNEL_OK")
</pallas_src>

<mosaic_0001>
module attributes {stable_mosaic.version = 11 : i64} {
  func.func @dynamics_kernel(%arg0: i32, %arg1: memref<8x32xf32, #tpu.memory_space<vmem>>, %arg2: memref<32x32xf32, #tpu.memory_space<vmem>>, %arg3: memref<8x32xf32, #tpu.memory_space<vmem>>) attributes {dimension_semantics = [#tpu.dimension_semantics<parallel>], iteration_bounds = array<i64: 1>, scalar_prefetch = 0 : i64, scratch_operands = 0 : i64, tpu.core_type = #tpu.core_type<tc>, window_params = [{transform_indices = @transform_0, window_bounds = array<i64: 8, 32>}, {pipeline_mode = #tpu.pipeline_mode<synchronous>, transform_indices = @transform_1, window_bounds = array<i64: 32, 32>}, {transform_indices = @transform_2, window_bounds = array<i64: 8, 32>}]} {
    %c0 = arith.constant 0 : index
    %c0_0 = arith.constant 0 : index
    %0 = vector.load %arg1[%c0, %c0_0] : memref<8x32xf32, #tpu.memory_space<vmem>>, vector<8x32xf32>
    %c0_1 = arith.constant 0 : index
    %c0_2 = arith.constant 0 : index
    %1 = vector.load %arg2[%c0_1, %c0_2] : memref<32x32xf32, #tpu.memory_space<vmem>>, vector<32x32xf32>
    %cst = arith.constant dense<0.000000e+00> : vector<8x32xf32>
    %2 = tpu.matmul %0, %1, %cst {dimension_numbers = #tpu.dot_dimension_numbers<[1], [1], [0], [0], [0, 0, 1, 0], [], []>} : vector<8x32xf32>, vector<32x32xf32>, vector<8x32xf32> -> vector<8x32xf32>
    %c0_3 = arith.constant 0 : index
    %c0_4 = arith.constant 0 : index
    %3 = vector.load %arg3[%c0_3, %c0_4] : memref<8x32xf32, #tpu.memory_space<vmem>>, vector<8x32xf32>
    tpu.vector_store %arg3[%c0_3, %c0_4], %2 {strides = array<i32>} : memref<8x32xf32, #tpu.memory_space<vmem>>, vector<8x32xf32>,
    return
  }
  func.func @transform_0(%arg0: i32) -> (i32, i32) {
    %c0_i32 = arith.constant 0 : i32
    %c0_i32_0 = arith.constant 0 : i32
    return %arg0, %c0_i32 : i32, i32
  }
  func.func @transform_1(%arg0: i32) -> (i32, i32) {
    %c0_i32 = arith.constant 0 : i32
    %c0_i32_0 = arith.constant 0 : i32
    %c0_i32_1 = arith.constant 0 : i32
    return %c0_i32, %c0_i32_0 : i32, i32
  }
  func.func @transform_2(%arg0: i32) -> (i32, i32) {
    %c0_i32 = arith.constant 0 : i32
    %c0_i32_0 = arith.constant 0 : i32
    return %arg0, %c0_i32 : i32, i32
  }
}

</mosaic_0001>

<llo_original>
// kernel: tpu_custom_call.1
$region0: #{tpu_custom_call.1}
  #allocation0 [shape = 'u32[]', space=smem, size = 0x4, offset = 0x4, fixed_abs, tag = 'smem constant byte address 0x4 - core index']
  #allocation1 [shape = 'u32[72,128]{1,0:T(1,128)}', space=vmem, size = 0x9000, scoped, tag = 'internal scratch']
  %s0 = inlined_call_operand.hbm [shape: f32[8,32], index: 0, kind: input, shape index: {}]
  %s1 = inlined_call_operand.hbm [shape: f32[32,32], index: 1, kind: input, shape index: {}]
  %s2 = inlined_call_operand.hbm [shape: f32[8,32], index: 2, kind: output, shape index: {}]
  %s3 = sld [smem:[#allocation0]]
  $region26: #{tpu_custom_call.1} parent=0
    _
  %s5 = ssub.s32 1, %s3
  %s6 = scalar_select 0, %s5, %s3
  $region1: #{tpu_custom_call.1} parent=0
    #allocation2 [shape = 'u8[4096]{0}', space=vmem, size = 0x1000, scoped, tag = 'input window, operand 0, single buffered']
    #allocation3 [shape = 's32[1]{0}', space=sflag, size = 0x4, scoped, tag = 'scoped memory for tpu_custom_call.1']
    #allocation4 [shape = 's32[1]{0}', space=sflag, size = 0x4, scoped, tag = 'scoped memory for tpu_custom_call.1']
    #allocation5 [shape = 'u8[16384]{0}', space=vmem, size = 0x4000, scoped, tag = 'input window, operand 1, single buffered']
    #allocation6 [shape = 's32[1]{0}', space=sflag, size = 0x4, scoped, tag = 'scoped memory for tpu_custom_call.1']
    #allocation7 [shape = 'u8[4096]{0}', space=vmem, size = 0x1000, scoped, tag = 'output window, operand 0, single buffered']
    %7 = vsyncpa [#allocation3], 0
    %8 = vsyncpa [#allocation6], 0
    %9 = vsyncpa [#allocation4], 0
    // Predicated region
    $region2: #{tpu_custom_call.1} parent=1 // pred_check
      _
    $region3: #{tpu_custom_call.1} parent=1 // pred_check_branch
      %11 = sbr.rel (0) target = $region5
    $region4: #{tpu_custom_call.1} parent=1 // pred_region
      %13 = vsyncadd [#allocation3], 0
      %s15 = sshll.u32 %s0, 4
      %s16 = int_to_ptr.hbm [resolvable:$true] %s15
      %s17 = sshll.u32 [#allocation2], 4
      %s18 = int_to_ptr.vmem [resolvable:$true] %s17
      %20 = dma.hbm_to_vmem [thread:$0]  %s16, 128, %s18, [#allocation3]
    $region5: #{tpu_custom_call.1} parent=1 // pred_fallthru
      _
    // Predicated region
    $region6: #{tpu_custom_call.1} parent=1 // pred_check
      _
    $region7: #{tpu_custom_call.1} parent=1 // pred_check_branch
      %22 = sbr.rel (0) target = $region9
    $region8: #{tpu_custom_call.1} parent=1 // pred_region
      %24 = vsyncadd [#allocation6], 0
      %s25 = sshll.u32 %s1, 4
      %s26 = int_to_ptr.hbm [resolvable:$true] %s25
      %s27 = sshll.u32 [#allocation5], 4
      %s28 = int_to_ptr.vmem [resolvable:$true] %s27
      %33 = dma.hbm_to_vmem [thread:$0]  %s26, 512, %s28, [#allocation6], 128, 128, 8
    $region9: #{tpu_custom_call.1} parent=1 // pred_fallthru
      _
    // Predicated region
    $region10: #{tpu_custom_call.1} parent=1 // pred_check
      _
    $region11: #{tpu_custom_call.1} parent=1 // pred_check_branch
      %35 = sbr.rel (0) target = $region13
    $region12: #{tpu_custom_call.1} parent=1 // pred_region
      %37 = dma.done [#allocation3], 128
    $region13: #{tpu_custom_call.1} parent=1 // pred_fallthru
      _
    // Predicated region
    $region14: #{tpu_custom_call.1} parent=1 // pred_check
      _
    $region15: #{tpu_custom_call.1} parent=1 // pred_check_branch
      %39 = sbr.rel (0) target = $region17
    $region16: #{tpu_custom_call.1} parent=1 // pred_region
      %41 = dma.done [#allocation6], 512
    $region17: #{tpu_custom_call.1} parent=1 // pred_fallthru
      _
    %v42 = vld [vmem:[#allocation2] sm:$0xff]
    %v43 = vld [vmem:[#allocation5] sm:$0xff]
    %v44 = vld [vmem:[#allocation5 + $0x8] sm:$0xff]
    %v45 = vld [vmem:[#allocation5 + $0x10] sm:$0xff]
    %v46 = vld [vmem:[#allocation5 + $0x18] sm:$0xff]
    %vm47 = vcmask 261120
    %v49 = vsel %vm47, %v42, 0
    %v52 = vsel %vm47, %v43, 0
    %v55 = vsel %vm47, %v44, 0
    %v58 = vsel %vm47, %v45, 0
    %v61 = vsel %vm47, %v46, 0
    %63 = vmatpush.xpose.msra.mxu0 0.0
    %64 = vmatpush.xpose.msra.mxu0 0.0
    %65 = vmatpush.xpose.msra.mxu0 0.0
    %66 = vmatpush.xpose.msra.mxu0 0.0
    %67 = vmatpush.xpose.msra.mxu0 0.0
    %68 = vmatpush.xpose.msra.mxu0 0.0
    %69 = vmatpush.xpose.msra.mxu0 0.0
    %70 = vmatpush.xpose.msra.mxu0 0.0
    %71 = vmatpush.xpose.msra.mxu0 0.0
    %72 = vmatpush.xpose.msra.mxu0 0.0
    %73 = vmatpush.xpose.msra.mxu0 0.0
    %74 = vmatpush.xpose.msra.mxu0 0.0
    %75 = vmatpush.xpose.msra.mxu0 %v61
    %76 = vmatpush.xpose.msra.mxu0 %v58
    %77 = vmatpush.xpose.msra.mxu0 %v55
    %78 = vmatpush.xpose.msra.mxu0 %v52
    %79 = vmatmul.f32.gmra.mxu0 %v49
    %v80 = vpop.f32.mrf.mxu0
    %v81 = vadd.f32 0.0, %v80
    %82 = vdwg.mxu0
    %83 = vst.msk [vmem:[#allocation7] sm:$0xff] %vm47, %v81
    // Predicated region
    $region18: #{tpu_custom_call.1} parent=1 // pred_check
      _
    $region19: #{tpu_custom_call.1} parent=1 // pred_check_branch
      %85 = sbr.rel (0) target = $region21
    $region20: #{tpu_custom_call.1} parent=1 // pred_region
      %87 = vsyncadd [#allocation4], 0
      %s89 = sshll.u32 [#allocation7], 4
      %s90 = int_to_ptr.vmem [resolvable:$true] %s89
      %s91 = sshll.u32 %s2, 4
      %s92 = int_to_ptr.hbm [resolvable:$true] %s91
      %94 = dma.vmem_to_hbm [thread:$0]  %s90, 128, %s92, [#allocation4]
    $region21: #{tpu_custom_call.1} parent=1 // pred_fallthru
      _
    // Predicated region
    $region22: #{tpu_custom_call.1} parent=1 // pred_check
      _
    $region23: #{tpu_custom_call.1} parent=1 // pred_check_branch
      %96 = sbr.rel (0) target = $region25
    $region24: #{tpu_custom_call.1} parent=1 // pred_region
      %98 = dma.done [#allocation4], 128
    $region25: #{tpu_custom_call.1} parent=1 // pred_fallthru
      _
    %99 = vsyncpa [#allocation3], 1
    %100 = vsyncpa [#allocation6], 1
    %101 = vsyncpa [#allocation4], 1

</llo_original>
